<compile_context>
chip_gen: v7x
topology: tpu7x:2x2x1
jax: 0.10.0
libtpu: 0.0.40
codegen_flags: <defaults>
</compile_context>

<pallas_src>
import jax
import jax.numpy as jnp
from jax.experimental import pallas as pl
from jax.experimental.pallas import tpu as pltpu

_LANE = 128
_MAX_BATCH_TILE = 4096   # rows per grid step; keeps double-buffered x/out + activations
                         # comfortably under the v7x 64 MiB/TC VMEM ceiling


def _round_up(n, m):
    return ((n + m - 1) // m) * m


def _pad_to(a, shape):
    return jnp.pad(a, [(0, t - s) for s, t in zip(a.shape, shape)])


def dqn_kernel(x_ref, w1_ref, b1_ref, w2_ref, b2_ref, w3_ref, b3_ref,
               w4_ref, b4_ref, o_ref):
    cdt = w1_ref.dtype  # MXU operand dtype (f32 or bf16); accumulation is always f32
    # Layer 1: Linear + ReLU
    h = jnp.dot(x_ref[...].astype(cdt), w1_ref[...],
                preferred_element_type=jnp.float32) + b1_ref[...]
    h = jnp.maximum(h, 0.0).astype(cdt)
    # Layer 2: Linear + ReLU
    h = jnp.dot(h, w2_ref[...], preferred_element_type=jnp.float32) + b2_ref[...]
    h = jnp.maximum(h, 0.0).astype(cdt)
    # Layer 3: Linear + ReLU
    h = jnp.dot(h, w3_ref[...], preferred_element_type=jnp.float32) + b3_ref[...]
    h = jnp.maximum(h, 0.0).astype(cdt)
    # Output layer: Linear (no activation), N = action_size (unpadded) -> store only the
    # bytes the caller needs; the tiny masked store is noise vs. the HBM bytes it saves.
    o_ref[...] = (jnp.dot(h, w4_ref[...], preferred_element_type=jnp.float32)
                  + b4_ref[...]).astype(o_ref.dtype)


def prepare_dqn_params(params, compute_dtype=jnp.float32):
    """Pad / cast DQN parameters ONCE, outside the per-call (per-training-step) path.

    params: (w1, b1, w2, b2, w3, b3, w4, b4) with wi [in, out] (transposed vs. PyTorch)
            and bi [1, out].
    Hidden feature dims are zero-padded to multiples of 128 (lane width) so every matmul,
    bias add and ReLU runs on full (8,128) vregs; zero columns feed zero rows of the next
    weight, so results are exact.  The FINAL layer's out dim stays action_size so the HBM
    output is never padded.
    """
    w1, b1, w2, b2, w3, b3, w4, b4 = params
    S = w1.shape[0]
    A = w4.shape[1]
    H1 = _round_up(w1.shape[1], _LANE)
    H2 = _round_up(w2.shape[1], _LANE)
    H3 = _round_up(w3.shape[1], _LANE)
    # NOTE: x keeps its natural width S; biases stay f32 (added after f32 accumulation).
    return (
        _pad_to(w1, (S, H1)).astype(compute_dtype),
        _pad_to(b1, (1, H1)).astype(jnp.float32),
        _pad_to(w2, (H1, H2)).astype(compute_dtype),
        _pad_to(b2, (1, H2)).astype(jnp.float32),
        _pad_to(w3, (H2, H3)).astype(compute_dtype),
        _pad_to(b3, (1, H3)).astype(jnp.float32),
        _pad_to(w4, (H3, A)).astype(compute_dtype),   # out dim left at action_size
        jnp.reshape(b4, (1, A)).astype(jnp.float32),
    )


def _choose_batch_tile(B):
    if B <= _MAX_BATCH_TILE:
        return B  # single tile; block shape == full array dims, no batch padding needed
    # largest multiple-of-8 divisor of B that fits in one tile (avoids padding x)
    for t in range(_MAX_BATCH_TILE, 7, -8):
        if B % t == 0:
            return t
    return _MAX_BATCH_TILE  # no clean divisor -> rare fallback: pad the batch


def dqn_forward(x, prepared_params, *, batch_tile=None,
                vmem_limit_bytes=32 * 1024 * 1024):
    """Fused DQN MLP forward.

    x: [B, state_size] float32 (left in its HBM dtype; any cast happens in-kernel)
    prepared_params: output of prepare_dqn_params()
    """
    B, S = x.shape
    A = prepared_params[-1].shape[1]
    assert prepared_params[0].shape[0] == S, "state_size mismatch with prepared params"

    if batch_tile is None:
        batch_tile = _choose_batch_tile(B)
    batch_tile = int(batch_tile)

    x_in = x
    B_pad = B
    if B % batch_tile != 0:
        # rare fallback path: one extra copy of x so the tile divides the batch
        B_pad = _round_up(B, batch_tile)
        x_in = jnp.pad(x, ((0, B_pad - B), (0, 0)))

    grid = (B_pad // batch_tile,)

    x_spec = pl.BlockSpec((batch_tile, S), lambda i: (i, 0))
    # Parameters are grid-invariant (constant index_map): single-buffer them instead of
    # wasting VMEM double-buffering ~0.5 MiB of weights that never change across steps.
    param_specs = [
        pl.BlockSpec(p.shape, lambda i: (0, 0), pipeline_mode=pl.Buffered(1))
        for p in prepared_params
    ]
    out_spec = pl.BlockSpec((batch_tile, A), lambda i: (i, 0))

    out = pl.pallas_call(
        dqn_kernel,
        out_shape=jax.ShapeDtypeStruct((B_pad, A), jnp.float32),
        grid_spec=pltpu.PrefetchScalarGridSpec(
            num_scalar_prefetch=0,
            grid=grid,
            in_specs=[x_spec] + param_specs,
            out_specs=out_spec,
        ),
        compiler_params=pltpu.CompilerParams(
            dimension_semantics=("parallel",),
            vmem_limit_bytes=vmem_limit_bytes),
    )(x_in, *prepared_params)

    return out if B_pad == B else out[:B]


def init_dqn_params(key, state_size, action_size, hidden_layers=(128, 64, 64)):
    """Deterministic init mimicking PyTorch nn.Linear (uniform(-1/sqrt(fan_in), +1/sqrt(fan_in)))."""
    sizes = [state_size] + list(hidden_layers) + [action_size]
    params = []
    for fan_in, fan_out in zip(sizes[:-1], sizes[1:]):
        key, kw, kb = jax.random.split(key, 3)
        bound = 1.0 / jnp.sqrt(jnp.float32(fan_in))
        w = jax.random.uniform(kw, (fan_in, fan_out), jnp.float32, -bound, bound)
        b = jax.random.uniform(kb, (1, fan_out), jnp.float32, -bound, bound)
        params += [w, b]
    return tuple(params)


def dqn_reference(x, params):
    w1, b1, w2, b2, w3, b3, w4, b4 = params
    h = jnp.maximum(x @ w1 + b1, 0.0)
    h = jnp.maximum(h @ w2 + b2, 0.0)
    h = jnp.maximum(h @ w3 + b3, 0.0)
    return h @ w4 + b4


if __name__ == "__main__":
    key = jax.random.PRNGKey(0)
    state_size = 12     # e.g. global-routing state vector
    action_size = 6     # 6 routing actions
    batch = 256

    kx, kp = jax.random.split(key)
    x = jax.random.normal(kx, (batch, state_size), jnp.float32)
    params = init_dqn_params(kp, state_size, action_size, hidden_layers=(128, 64, 64))
    ref = dqn_reference(x, params)

    # f32 path (exact), single tile (grid=1) -- the common small/medium-batch case
    prepped_f32 = prepare_dqn_params(params, compute_dtype=jnp.float32)
    out = jax.block_until_ready(dqn_forward(x, prepped_f32))
    assert out.shape == (batch, action_size)
    assert jnp.allclose(out, ref, atol=2e-5, rtol=2e-5), "f32 mismatch vs JAX reference"

    # multi-tile path (grid=4) to exercise the pipelined / megacore-shardable branch
    out_tiled = jax.block_until_ready(dqn_forward(x, prepped_f32, batch_tile=64))
    assert jnp.allclose(out_tiled, ref, atol=2e-5, rtol=2e-5), "tiled mismatch vs reference"

    # ragged batch (not a multiple of 8): single full-extent block, no padding copies
    out_ragged = jax.block_until_ready(dqn_forward(x[:13], prepped_f32))
    assert jnp.allclose(out_ragged, ref[:13], atol=2e-5, rtol=2e-5), "ragged-batch mismatch"

    # bf16-weight option (v6e/v7x): x stays f32 in HBM, cast happens in-kernel, f32 accum
    prepped_bf16 = prepare_dqn_params(params, compute_dtype=jnp.bfloat16)
    out_bf16 = jax.block_until_ready(dqn_forward(x, prepped_bf16))
    assert out_bf16.shape == (batch, action_size)
    assert bool(jnp.all(jnp.isfinite(out_bf16)))
    assert jnp.allclose(out_bf16, ref, atol=5e-2, rtol=5e-2), "bf16 mismatch vs JAX reference"

    print("KERNEL_OK")
</pallas_src>

<mosaic_0001>
module attributes {stable_mosaic.version = 11 : i64} {
  func.func @dqn_kernel(%arg0: i32, %arg1: memref<256x12xf32, #tpu.memory_space<vmem>>, %arg2: memref<12x128xf32, #tpu.memory_space<vmem>>, %arg3: memref<1x128xf32, #tpu.memory_space<vmem>>, %arg4: memref<128x128xf32, #tpu.memory_space<vmem>>, %arg5: memref<1x128xf32, #tpu.memory_space<vmem>>, %arg6: memref<128x128xf32, #tpu.memory_space<vmem>>, %arg7: memref<1x128xf32, #tpu.memory_space<vmem>>, %arg8: memref<128x6xf32, #tpu.memory_space<vmem>>, %arg9: memref<1x6xf32, #tpu.memory_space<vmem>>, %arg10: memref<256x6xf32, #tpu.memory_space<vmem>>) attributes {dimension_semantics = [#tpu.dimension_semantics<parallel>], iteration_bounds = array<i64: 1>, scalar_prefetch = 0 : i64, scratch_operands = 0 : i64, tpu.core_type = #tpu.core_type<tc>, window_params = [{transform_indices = @transform_0, window_bounds = array<i64: 256, 12>}, {pipeline_mode = #tpu.pipeline_mode<synchronous>, transform_indices = @transform_1, window_bounds = array<i64: 12, 128>}, {pipeline_mode = #tpu.pipeline_mode<synchronous>, transform_indices = @transform_2, window_bounds = array<i64: 1, 128>}, {pipeline_mode = #tpu.pipeline_mode<synchronous>, transform_indices = @transform_3, window_bounds = array<i64: 128, 128>}, {pipeline_mode = #tpu.pipeline_mode<synchronous>, transform_indices = @transform_4, window_bounds = array<i64: 1, 128>}, {pipeline_mode = #tpu.pipeline_mode<synchronous>, transform_indices = @transform_5, window_bounds = array<i64: 128, 128>}, {pipeline_mode = #tpu.pipeline_mode<synchronous>, transform_indices = @transform_6, window_bounds = array<i64: 1, 128>}, {pipeline_mode = #tpu.pipeline_mode<synchronous>, transform_indices = @transform_7, window_bounds = array<i64: 128, 6>}, {pipeline_mode = #tpu.pipeline_mode<synchronous>, transform_indices = @transform_8, window_bounds = array<i64: 1, 6>}, {transform_indices = @transform_9, window_bounds = array<i64: 256, 6>}]} {
    %c0 = arith.constant 0 : index
    %c0_0 = arith.constant 0 : index
    %0 = vector.load %arg1[%c0, %c0_0] : memref<256x12xf32, #tpu.memory_space<vmem>>, vector<256x12xf32>
    %c0_1 = arith.constant 0 : index
    %c0_2 = arith.constant 0 : index
    %1 = vector.load %arg2[%c0_1, %c0_2] : memref<12x128xf32, #tpu.memory_space<vmem>>, vector<12x128xf32>
    %cst = arith.constant dense<0.000000e+00> : vector<256x128xf32>
    %2 = tpu.matmul %0, %1, %cst {dimension_numbers = #tpu.dot_dimension_numbers<[1], [0], [0], [1], [0, 0, 1, 1], [], []>} : vector<256x12xf32>, vector<12x128xf32>, vector<256x128xf32> -> vector<256x128xf32>
    %c0_3 = arith.constant 0 : index
    %c0_4 = arith.constant 0 : index
    %3 = vector.load %arg3[%c0_3, %c0_4] : memref<1x128xf32, #tpu.memory_space<vmem>>, vector<1x128xf32>
    %4 = vector.broadcast %3 : vector<1x128xf32> to vector<256x128xf32>
    %5 = arith.addf %2, %4 : vector<256x128xf32>
    %cst_5 = arith.constant 0.000000e+00 : f32
    %6 = vector.broadcast %cst_5 : f32 to vector<256x128xf32>
    %7 = arith.maximumf %5, %6 : vector<256x128xf32>
    %c0_6 = arith.constant 0 : index
    %c0_7 = arith.constant 0 : index
    %8 = vector.load %arg4[%c0_6, %c0_7] : memref<128x128xf32, #tpu.memory_space<vmem>>, vector<128x128xf32>
    %cst_8 = arith.constant dense<0.000000e+00> : vector<256x128xf32>
    %9 = tpu.matmul %7, %8, %cst_8 {dimension_numbers = #tpu.dot_dimension_numbers<[1], [0], [0], [1], [0, 0, 1, 1], [], []>} : vector<256x128xf32>, vector<128x128xf32>, vector<256x128xf32> -> vector<256x128xf32>
    %c0_9 = arith.constant 0 : index
    %c0_10 = arith.constant 0 : index
    %10 = vector.load %arg5[%c0_9, %c0_10] : memref<1x128xf32, #tpu.memory_space<vmem>>, vector<1x128xf32>
    %11 = vector.broadcast %10 : vector<1x128xf32> to vector<256x128xf32>
    %12 = arith.addf %9, %11 : vector<256x128xf32>
    %cst_11 = arith.constant 0.000000e+00 : f32
    %13 = vector.broadcast %cst_11 : f32 to vector<256x128xf32>
    %14 = arith.maximumf %12, %13 : vector<256x128xf32>
    %c0_12 = arith.constant 0 : index
    %c0_13 = arith.constant 0 : index
    %15 = vector.load %arg6[%c0_12, %c0_13] : memref<128x128xf32, #tpu.memory_space<vmem>>, vector<128x128xf32>
    %cst_14 = arith.constant dense<0.000000e+00> : vector<256x128xf32>
    %16 = tpu.matmul %14, %15, %cst_14 {dimension_numbers = #tpu.dot_dimension_numbers<[1], [0], [0], [1], [0, 0, 1, 1], [], []>} : vector<256x128xf32>, vector<128x128xf32>, vector<256x128xf32> -> vector<256x128xf32>
    %c0_15 = arith.constant 0 : index
    %c0_16 = arith.constant 0 : index
    %17 = vector.load %arg7[%c0_15, %c0_16] : memref<1x128xf32, #tpu.memory_space<vmem>>, vector<1x128xf32>
    %18 = vector.broadcast %17 : vector<1x128xf32> to vector<256x128xf32>
    %19 = arith.addf %16, %18 : vector<256x128xf32>
    %cst_17 = arith.constant 0.000000e+00 : f32
    %20 = vector.broadcast %cst_17 : f32 to vector<256x128xf32>
    %21 = arith.maximumf %19, %20 : vector<256x128xf32>
    %c0_18 = arith.constant 0 : index
    %c0_19 = arith.constant 0 : index
    %22 = vector.load %arg8[%c0_18, %c0_19] : memref<128x6xf32, #tpu.memory_space<vmem>>, vector<128x6xf32>
    %cst_20 = arith.constant dense<0.000000e+00> : vector<256x6xf32>
    %23 = tpu.matmul %21, %22, %cst_20 {dimension_numbers = #tpu.dot_dimension_numbers<[1], [0], [0], [1], [0, 0, 1, 1], [], []>} : vector<256x128xf32>, vector<128x6xf32>, vector<256x6xf32> -> vector<256x6xf32>
    %c0_21 = arith.constant 0 : index
    %c0_22 = arith.constant 0 : index
    %24 = vector.load %arg9[%c0_21, %c0_22] : memref<1x6xf32, #tpu.memory_space<vmem>>, vector<1x6xf32>
    %25 = vector.broadcast %24 : vector<1x6xf32> to vector<256x6xf32>
    %26 = arith.addf %23, %25 : vector<256x6xf32>
    %c0_23 = arith.constant 0 : index
    %c0_24 = arith.constant 0 : index
    %27 = vector.load %arg10[%c0_23, %c0_24] : memref<256x6xf32, #tpu.memory_space<vmem>>, vector<256x6xf32>
    tpu.vector_store %arg10[%c0_23, %c0_24], %26 {strides = array<i32>} : memref<256x6xf32, #tpu.memory_space<vmem>>, vector<256x6xf32>,
    return
  }
  func.func @transform_0(%arg0: i32) -> (i32, i32) {
    %c0_i32 = arith.constant 0 : i32
    %c0_i32_0 = arith.constant 0 : i32
    return %arg0, %c0_i32 : i32, i32
  }
  func.func @transform_1(%arg0: i32) -> (i32, i32) {
    %c0_i32 = arith.constant 0 : i32
    %c0_i32_0 = arith.constant 0 : i32
    %c0_i32_1 = arith.constant 0 : i32
    return %c0_i32, %c0_i32_0 : i32, i32
  }
  func.func @transform_2(%arg0: i32) -> (i32, i32) {
    %c0_i32 = arith.constant 0 : i32
    %c0_i32_0 = arith.constant 0 : i32
    %c0_i32_1 = arith.constant 0 : i32
    return %c0_i32, %c0_i32_0 : i32, i32
  }
  func.func @transform_3(%arg0: i32) -> (i32, i32) {
    %c0_i32 = arith.constant 0 : i32
    %c0_i32_0 = arith.constant 0 : i32
    %c0_i32_1 = arith.constant 0 : i32
    return %c0_i32, %c0_i32_0 : i32, i32
  }
  func.func @transform_4(%arg0: i32) -> (i32, i32) {
    %c0_i32 = arith.constant 0 : i32
    %c0_i32_0 = arith.constant 0 : i32
    %c0_i32_1 = arith.constant 0 : i32
    return %c0_i32, %c0_i32_0 : i32, i32
  }
  func.func @transform_5(%arg0: i32) -> (i32, i32) {
    %c0_i32 = arith.constant 0 : i32
    %c0_i32_0 = arith.constant 0 : i32
    %c0_i32_1 = arith.constant 0 : i32
    return %c0_i32, %c0_i32_0 : i32, i32
  }
  func.func @transform_6(%arg0: i32) -> (i32, i32) {
    %c0_i32 = arith.constant 0 : i32
    %c0_i32_0 = arith.constant 0 : i32
    %c0_i32_1 = arith.constant 0 : i32
    return %c0_i32, %c0_i32_0 : i32, i32
  }
  func.func @transform_7(%arg0: i32) -> (i32, i32) {
    %c0_i32 = arith.constant 0 : i32
    %c0_i32_0 = arith.constant 0 : i32
    %c0_i32_1 = arith.constant 0 : i32
    return %c0_i32, %c0_i32_0 : i32, i32
  }
  func.func @transform_8(%arg0: i32) -> (i32, i32) {
    %c0_i32 = arith.constant 0 : i32
    %c0_i32_0 = arith.constant 0 : i32
    %c0_i32_1 = arith.constant 0 : i32
    return %c0_i32, %c0_i32_0 : i32, i32
  }
  func.func @transform_9(%arg0: i32) -> (i32, i32) {
    %c0_i32 = arith.constant 0 : i32
    %c0_i32_0 = arith.constant 0 : i32
    return %arg0, %c0_i32 : i32, i32
  }
}

</mosaic_0001>

<llo_original>
// kernel: tpu_custom_call.1
$region0: #{tpu_custom_call.1}
  #allocation0 [shape = 'u32[]', space=smem, size = 0x4, offset = 0x4, fixed_abs, tag = 'smem constant byte address 0x4 - core index']
  #allocation1 [shape = 'u32[144,128]{1,0:T(1,128)}', space=vmem, size = 0x12000, scoped, tag = 'internal scratch']
  %s0 = inlined_call_operand.vmem [shape: f32[256,12], index: 0, kind: input, shape index: {}]
  %s1 = inlined_call_operand.vmem [shape: f32[12,128], index: 1, kind: input, shape index: {}]
  %s2 = inlined_call_operand.vmem [shape: f32[1,128], index: 2, kind: input, shape index: {}]
  %s3 = inlined_call_operand.vmem [shape: f32[128,128], index: 3, kind: input, shape index: {}]
  %s4 = inlined_call_operand.vmem [shape: f32[1,128], index: 4, kind: input, shape index: {}]
  %s5 = inlined_call_operand.vmem [shape: f32[128,128], index: 5, kind: input, shape index: {}]
  %s6 = inlined_call_operand.vmem [shape: f32[1,128], index: 6, kind: input, shape index: {}]
  %s7 = inlined_call_operand.vmem [shape: f32[128,6], index: 7, kind: input, shape index: {}]
  %s8 = inlined_call_operand.vmem [shape: f32[1,6], index: 8, kind: input, shape index: {}]
  %s9 = inlined_call_operand.vmem [shape: f32[256,6], index: 9, kind: output, shape index: {}]
  %s10 = sld [smem:[#allocation0]]
  $region46: #{tpu_custom_call.1} parent=0
    _
  %s12 = ssub.s32 1, %s10
  %s13 = scalar_select 0, %s12, %s10
  // Predicated region
  $region2: #{tpu_custom_call.1} parent=0 // pred_check
    _
  $region3: #{tpu_custom_call.1} parent=0 // pred_check_branch
    %15 = sbr.rel (0) target = $region5
  $region4: #{tpu_custom_call.1} parent=0 // pred_region
    _
  $region5: #{tpu_custom_call.1} parent=0 // pred_fallthru
    _
  // Predicated region
  $region6: #{tpu_custom_call.1} parent=0 // pred_check
    _
  $region7: #{tpu_custom_call.1} parent=0 // pred_check_branch
    %17 = sbr.rel (0) target = $region9
  $region8: #{tpu_custom_call.1} parent=0 // pred_region
    _
  $region9: #{tpu_custom_call.1} parent=0 // pred_fallthru
    _
  // Predicated region
  $region10: #{tpu_custom_call.1} parent=0 // pred_check
    _
  $region11: #{tpu_custom_call.1} parent=0 // pred_check_branch
    %19 = sbr.rel (0) target = $region13
  $region12: #{tpu_custom_call.1} parent=0 // pred_region
    _
  $region13: #{tpu_custom_call.1} parent=0 // pred_fallthru
    _
  // Predicated region
  $region14: #{tpu_custom_call.1} parent=0 // pred_check
    _
  $region15: #{tpu_custom_call.1} parent=0 // pred_check_branch
    %21 = sbr.rel (0) target = $region17
  $region16: #{tpu_custom_call.1} parent=0 // pred_region
    _
  $region17: #{tpu_custom_call.1} parent=0 // pred_fallthru
    _
  // Predicated region
  $region18: #{tpu_custom_call.1} parent=0 // pred_check
    _
  $region19: #{tpu_custom_call.1} parent=0 // pred_check_branch
    %23 = sbr.rel (0) target = $region21
  $region20: #{tpu_custom_call.1} parent=0 // pred_region
    _
  $region21: #{tpu_custom_call.1} parent=0 // pred_fallthru
    _
  // Predicated region
  $region22: #{tpu_custom_call.1} parent=0 // pred_check
    _
  $region23: #{tpu_custom_call.1} parent=0 // pred_check_branch
    %25 = sbr.rel (0) target = $region25
  $region24: #{tpu_custom_call.1} parent=0 // pred_region
    _
  $region25: #{tpu_custom_call.1} parent=0 // pred_fallthru
    _
  // Predicated region
  $region26: #{tpu_custom_call.1} parent=0 // pred_check
    _
  $region27: #{tpu_custom_call.1} parent=0 // pred_check_branch
    %27 = sbr.rel (0) target = $region29
  $region28: #{tpu_custom_call.1} parent=0 // pred_region
    _
  $region29: #{tpu_custom_call.1} parent=0 // pred_fallthru
    _
  // Predicated region
  $region30: #{tpu_custom_call.1} parent=0 // pred_check
    _
  $region31: #{tpu_custom_call.1} parent=0 // pred_check_branch
    %29 = sbr.rel (0) target = $region33
  $region32: #{tpu_custom_call.1} parent=0 // pred_region
    _
  $region33: #{tpu_custom_call.1} parent=0 // pred_fallthru
    _
  // Predicated region
  $region34: #{tpu_custom_call.1} parent=0 // pred_check
    _
  $region35: #{tpu_custom_call.1} parent=0 // pred_check_branch
    %31 = sbr.rel (0) target = $region37
  $region36: #{tpu_custom_call.1} parent=0 // pred_region
    _
  $region37: #{tpu_custom_call.1} parent=0 // pred_fallthru
    _
  %v32 = vld [vmem:[%s0] sm:$0xff]
  %v33 = vld [vmem:[%s0 + $0x8] sm:$0xff]
  %v34 = vld [vmem:[%s0 + $0x10] sm:$0xff]
  %v35 = vld [vmem:[%s0 + $0x18] sm:$0xff]
  %v36 = vld [vmem:[%s0 + $0x20] sm:$0xff]
  %v37 = vld [vmem:[%s0 + $0x28] sm:$0xff]
  %v38 = vld [vmem:[%s0 + $0x30] sm:$0xff]
  %v39 = vld [vmem:[%s0 + $0x38] sm:$0xff]
  %v40 = vld [vmem:[%s0 + $0x40] sm:$0xff]
  %v41 = vld [vmem:[%s0 + $0x48] sm:$0xff]
  %v42 = vld [vmem:[%s0 + $0x50] sm:$0xff]
  %v43 = vld [vmem:[%s0 + $0x58] sm:$0xff]
  %v44 = vld [vmem:[%s0 + $0x60] sm:$0xff]
  %v45 = vld [vmem:[%s0 + $0x68] sm:$0xff]
  %v46 = vld [vmem:[%s0 + $0x70] sm:$0xff]
  %v47 = vld [vmem:[%s0 + $0x78] sm:$0xff]
  %v48 = vld [vmem:[%s0 + $0x80] sm:$0xff]
  %v49 = vld [vmem:[%s0 + $0x88] sm:$0xff]
  %v50 = vld [vmem:[%s0 + $0x90] sm:$0xff]
  %v51 = vld [vmem:[%s0 + $0x98] sm:$0xff]
  %v52 = vld [vmem:[%s0 + $0xa0] sm:$0xff]
  %v53 = vld [vmem:[%s0 + $0xa8] sm:$0xff]
  %v54 = vld [vmem:[%s0 + $0xb0] sm:$0xff]
  %v55 = vld [vmem:[%s0 + $0xb8] sm:$0xff]
  %v56 = vld [vmem:[%s0 + $0xc0] sm:$0xff]
  %v57 = vld [vmem:[%s0 + $0xc8] sm:$0xff]
  %v58 = vld [vmem:[%s0 + $0xd0] sm:$0xff]
  %v59 = vld [vmem:[%s0 + $0xd8] sm:$0xff]
  %v60 = vld [vmem:[%s0 + $0xe0] sm:$0xff]
  %v61 = vld [vmem:[%s0 + $0xe8] sm:$0xff]
  %v62 = vld [vmem:[%s0 + $0xf0] sm:$0xff]
  %v63 = vld [vmem:[%s0 + $0xf8] sm:$0xff]
  %v64 = vld [vmem:[%s1] sm:$0xff]
  %v65 = vld [vmem:[%s1 + $0x8] sm:$0xf]
  %v66 = vld [vmem:[%s2] sm:$0x1]
  %v68 = vlaneseq
  %v69 = vshrl.u32 %v68, 7
  %v70 = vsub.s32 0, %v69
  %v71 = vrot.slane %v66, %v70
  %vm73 = vcmask 97280
  %v75 = vsel %vm73, %v32, 0
  %v78 = vsel %vm73, %v33, 0
  %v81 = vsel %vm73, %v34, 0
  %v84 = vsel %vm73, %v35, 0
  %v87 = vsel %vm73, %v36, 0
  %v90 = vsel %vm73, %v37, 0
  %v93 = vsel %vm73, %v38, 0
  %v96 = vsel %vm73, %v39, 0
  %v99 = vsel %vm73, %v40, 0
  %v102 = vsel %vm73, %v41, 0
  %v105 = vsel %vm73, %v42, 0
  %v108 = vsel %vm73, %v43, 0
  %v111 = vsel %vm73, %v44, 0
  %v114 = vsel %vm73, %v45, 0
  %v117 = vsel %vm73, %v46, 0
  %v120 = vsel %vm73, %v47, 0
  %v123 = vsel %vm73, %v48, 0
  %v126 = vsel %vm73, %v49, 0
  %v129 = vsel %vm73, %v50, 0
  %v132 = vsel %vm73, %v51, 0
  %v135 = vsel %vm73, %v52, 0
  %v138 = vsel %vm73, %v53, 0
  %v141 = vsel %vm73, %v54, 0
  %v144 = vsel %vm73, %v55, 0
  %v147 = vsel %vm73, %v56, 0
  %v150 = vsel %vm73, %v57, 0
  %v153 = vsel %vm73, %v58, 0
  %v156 = vsel %vm73, %v59, 0
  %v159 = vsel %vm73, %v60, 0
  %v162 = vsel %vm73, %v61, 0
  %v165 = vsel %vm73, %v62, 0
  %v168 = vsel %vm73, %v63, 0
  %vm170 = vcmask 1043456
  %v172 = vsel %vm170, %v65, 0
  %174 = vmatprep.subr.mxu0 0.0
  %175 = vmatpush1.msra.mxu0 %v64
  %176 = vmatprep.subr.mxu0 0.0
  %177 = vmatpush1.msra.mxu0 %v172
  %178 = vmatprep.subr.mxu0 0.0
  %179 = vmatpush1.msra.mxu0 0.0
  %180 = vmatprep.subr.mxu0 0.0
  %181 = vmatpush1.msra.mxu0 0.0
  %182 = vmatprep.subr.mxu0 0.0
  %183 = vmatpush1.msra.mxu0 0.0
  %184 = vmatprep.subr.mxu0 0.0
  %185 = vmatpush1.msra.mxu0 0.0
  %186 = vmatprep.subr.mxu0 0.0
  %187 = vmatpush1.msra.mxu0 0.0
  %188 = vmatprep.subr.mxu0 0.0
  %189 = vmatpush1.msra.mxu0 0.0
  %190 = vmatprep.subr.mxu0 0.0
  %191 = vmatpush1.msra.mxu0 0.0
  %192 = vmatprep.subr.mxu0 0.0
  %193 = vmatpush1.msra.mxu0 0.0
  %194 = vmatprep.subr.mxu0 0.0
  %195 = vmatpush1.msra.mxu0 0.0
  %196 = vmatprep.subr.mxu0 0.0
  %197 = vmatpush1.msra.mxu0 0.0
  %198 = vmatprep.subr.mxu0 0.0
  %199 = vmatpush1.msra.mxu0 0.0
  %200 = vmatprep.subr.mxu0 0.0
  %201 = vmatpush1.msra.mxu0 0.0
  %202 = vmatprep.subr.mxu0 0.0
  %203 = vmatpush1.msra.mxu0 0.0
  %204 = vmatprep.subr.mxu0 0.0
  %205 = vmatpush1.msra.mxu0 0.0
  %206 = vmatprep.subr.mxu0 0.0
  %207 = vmatpush1.msra.mxu0 0.0
  %208 = vmatprep.subr.mxu0 0.0
  %209 = vmatpush1.msra.mxu0 0.0
  %210 = vmatprep.subr.mxu0 0.0
  %211 = vmatpush1.msra.mxu0 0.0
  %212 = vmatprep.subr.mxu0 0.0
  %213 = vmatpush1.msra.mxu0 0.0
  %214 = vmatprep.subr.mxu0 0.0
  %215 = vmatpush1.msra.mxu0 0.0
  %216 = vmatprep.subr.mxu0 0.0
  %217 = vmatpush1.msra.mxu0 0.0
  %218 = vmatprep.subr.mxu0 0.0
  %219 = vmatpush1.msra.mxu0 0.0
  %220 = vmatprep.subr.mxu0 0.0
  %221 = vmatpush1.msra.mxu0 0.0
  %222 = vmatprep.subr.mxu0 0.0
  %223 = vmatpush1.msra.mxu0 0.0
  %224 = vmatprep.subr.mxu0 0.0
  %225 = vmatpush1.msra.mxu0 0.0
  %226 = vmatprep.subr.mxu0 0.0
  %227 = vmatpush1.msra.mxu0 0.0
  %228 = vmatprep.subr.mxu0 0.0
  %229 = vmatpush1.msra.mxu0 0.0
  %230 = vmatprep.subr.mxu0 0.0
  %231 = vmatpush1.msra.mxu0 0.0
  %232 = vmatprep.subr.mxu0 0.0
  %233 = vmatpush1.msra.mxu0 0.0
  %234 = vmatprep.subr.mxu0 0.0
  %235 = vmatpush1.msra.mxu0 0.0
  %236 = vmatprep.subr.mxu0 0.0
  %237 = vmatpush1.msra.mxu0 0.0
  %238 = vmatprep.mubr.f32.mxu0 0.0
  %239 = vmatmul.mubr.f32.gmra.mrb[0].mxu0 %v75
  %v240 = vpop.f32.mrb[0].mxu0
  %v241 = vadd.f32 %v71, %v240
  %v242 = vpop.f32.mrb[0].mxu0
  %243 = vmatprep.mubr.f32.mxu0 0.0
  %244 = vmatmul.mubr.f32.gmra.mrb[0].mxu0 %v78
  %v245 = vpop.f32.mrb[0].mxu0
  %v246 = vadd.f32 %v71, %v245
  %v247 = vpop.f32.mrb[0].mxu0
  %248 = vmatprep.mubr.f32.mxu0 0.0
  %249 = vmatmul.mubr.f32.gmra.mrb[0].mxu0 %v81
  %v250 = vpop.f32.mrb[0].mxu0
  %v251 = vadd.f32 %v71, %v250
  %v252 = vpop.f32.mrb[0].mxu0
  %253 = vmatprep.mubr.f32.mxu0 0.0
  %254 = vmatmul.mubr.f32.gmra.mrb[0].mxu0 %v84
  %v255 = vpop.f32.mrb[0].mxu0
  %v256 = vadd.f32 %v71, %v255
  %v257 = vpop.f32.mrb[0].mxu0
  %258 = vmatprep.mubr.f32.mxu0 0.0
  %259 = vmatmul.mubr.f32.gmra.mrb[0].mxu0 %v87
  %v260 = vpop.f32.mrb[0].mxu0
  %v261 = vadd.f32 %v71, %v260
  %v262 = vpop.f32.mrb[0].mxu0
  %263 = vmatprep.mubr.f32.mxu0 0.0
  %264 = vmatmul.mubr.f32.gmra.mrb[0].mxu0 %v90
  %v265 = vpop.f32.mrb[0].mxu0
  %v266 = vadd.f32 %v71, %v265
  %v267 = vpop.f32.mrb[0].mxu0
  %268 = vmatprep.mubr.f32.mxu0 0.0
  %269 = vmatmul.mubr.f32.gmra.mrb[0].mxu0 %v93
  %v270 = vpop.f32.mrb[0].mxu0
  %v271 = vadd.f32 %v71, %v270
  %v272 = vpop.f32.mrb[0].mxu0
  %273 = vmatprep.mubr.f32.mxu0 0.0
  %274 = vmatmul.mubr.f32.gmra.mrb[0].mxu0 %v96
  %v275 = vpop.f32.mrb[0].mxu0
  %v276 = vadd.f32 %v71, %v275
  %v277 = vpop.f32.mrb[0].mxu0
  %278 = vmatprep.mubr.f32.mxu0 0.0
  %279 = vmatmul.mubr.f32.gmra.mrb[0].mxu0 %v99
  %v280 = vpop.f32.mrb[0].mxu0
  %v281 = vadd.f32 %v71, %v280
  %v282 = vpop.f32.mrb[0].mxu0
  %283 = vmatprep.mubr.f32.mxu0 0.0
  %284 = vmatmul.mubr.f32.gmra.mrb[0].mxu0 %v102
  %v285 = vpop.f32.mrb[0].mxu0
  %v286 = vadd.f32 %v71, %v285
  %v287 = vpop.f32.mrb[0].mxu0
  %288 = vmatprep.mubr.f32.mxu0 0.0
  %289 = vmatmul.mubr.f32.gmra.mrb[0].mxu0 %v105
  %v290 = vpop.f32.mrb[0].mxu0
  %v291 = vadd.f32 %v71, %v290
  %v292 = vpop.f32.mrb[0].mxu0
  %293 = vmatprep.mubr.f32.mxu0 0.0
  %294 = vmatmul.mubr.f32.gmra.mrb[0].mxu0 %v108
  %v295 = vpop.f32.mrb[0].mxu0
  %v296 = vadd.f32 %v71, %v295
  %v297 = vpop.f32.mrb[0].mxu0
  %298 = vmatprep.mubr.f32.mxu0 0.0
  %299 = vmatmul.mubr.f32.gmra.mrb[0].mxu0 %v111
  %v300 = vpop.f32.mrb[0].mxu0
  %v301 = vadd.f32 %v71, %v300
  %v302 = vpop.f32.mrb[0].mxu0
  %303 = vmatprep.mubr.f32.mxu0 0.0
  %304 = vmatmul.mubr.f32.gmra.mrb[0].mxu0 %v114
  %v305 = vpop.f32.mrb[0].mxu0
  %v306 = vadd.f32 %v71, %v305
  %v307 = vpop.f32.mrb[0].mxu0
  %308 = vmatprep.mubr.f32.mxu0 0.0
  %309 = vmatmul.mubr.f32.gmra.mrb[0].mxu0 %v117
  %v310 = vpop.f32.mrb[0].mxu0
  %v311 = vadd.f32 %v71, %v310
  %v312 = vpop.f32.mrb[0].mxu0
  %313 = vmatprep.mubr.f32.mxu0 0.0
  %314 = vmatmul.mubr.f32.gmra.mrb[0].mxu0 %v120
  %v315 = vpop.f32.mrb[0].mxu0
  %v316 = vadd.f32 %v71, %v315
  %v317 = vpop.f32.mrb[0].mxu0
  %318 = vmatprep.mubr.f32.mxu0 0.0
  %319 = vmatmul.mubr.f32.gmra.mrb[0].mxu0 %v123
  %v320 = vpop.f32.mrb[0].mxu0
  %v321 = vadd.f32 %v71, %v320
  %v322 = vpop.f32.mrb[0].mxu0
  %323 = vmatprep.mubr.f32.mxu0 0.0
  %324 = vmatmul.mubr.f32.gmra.mrb[0].mxu0 %v126
  %v325 = vpop.f32.mrb[0].mxu0
  %v326 = vadd.f32 %v71, %v325
  %v327 = vpop.f32.mrb[0].mxu0
  %328 = vmatprep.mubr.f32.mxu0 0.0
  %329 = vmatmul.mubr.f32.gmra.mrb[0].mxu0 %v129
  %v330 = vpop.f32.mrb[0].mxu0
  %v331 = vadd.f32 %v71, %v330
  %v332 = vpop.f32.mrb[0].mxu0
  %333 = vmatprep.mubr.f32.mxu0 0.0
  %334 = vmatmul.mubr.f32.gmra.mrb[0].mxu0 %v132
  %v335 = vpop.f32.mrb[0].mxu0
  %v336 = vadd.f32 %v71, %v335
  %v337 = vpop.f32.mrb[0].mxu0
  %338 = vmatprep.mubr.f32.mxu0 0.0
  %339 = vmatmul.mubr.f32.gmra.mrb[0].mxu0 %v135
  %v340 = vpop.f32.mrb[0].mxu0
  %v341 = vadd.f32 %v71, %v340
  %v342 = vpop.f32.mrb[0].mxu0
  %343 = vmatprep.mubr.f32.mxu0 0.0
  %344 = vmatmul.mubr.f32.gmra.mrb[0].mxu0 %v138
  %v345 = vpop.f32.mrb[0].mxu0
  %v346 = vadd.f32 %v71, %v345
  %v347 = vpop.f32.mrb[0].mxu0
  %348 = vmatprep.mubr.f32.mxu0 0.0
  %349 = vmatmul.mubr.f32.gmra.mrb[0].mxu0 %v141
  %v350 = vpop.f32.mrb[0].mxu0
  %v351 = vadd.f32 %v71, %v350
  %v352 = vpop.f32.mrb[0].mxu0
  %353 = vmatprep.mubr.f32.mxu0 0.0
  %354 = vmatmul.mubr.f32.gmra.mrb[0].mxu0 %v144
  %v355 = vpop.f32.mrb[0].mxu0
  %v356 = vadd.f32 %v71, %v355
  %v357 = vpop.f32.mrb[0].mxu0
  %358 = vmatprep.mubr.f32.mxu0 0.0
  %359 = vmatmul.mubr.f32.gmra.mrb[0].mxu0 %v147
  %v360 = vpop.f32.mrb[0].mxu0
  %v361 = vadd.f32 %v71, %v360
  %v362 = vpop.f32.mrb[0].mxu0
  %363 = vmatprep.mubr.f32.mxu0 0.0
  %364 = vmatmul.mubr.f32.gmra.mrb[0].mxu0 %v150
  %v365 = vpop.f32.mrb[0].mxu0
  %v366 = vadd.f32 %v71, %v365
  %v367 = vpop.f32.mrb[0].mxu0
  %368 = vmatprep.mubr.f32.mxu0 0.0
  %369 = vmatmul.mubr.f32.gmra.mrb[0].mxu0 %v153
  %v370 = vpop.f32.mrb[0].mxu0
  %v371 = vadd.f32 %v71, %v370
  %v372 = vpop.f32.mrb[0].mxu0
  %373 = vmatprep.mubr.f32.mxu0 0.0
  %374 = vmatmul.mubr.f32.gmra.mrb[0].mxu0 %v156
  %v375 = vpop.f32.mrb[0].mxu0
  %v376 = vadd.f32 %v71, %v375
  %v377 = vpop.f32.mrb[0].mxu0
  %378 = vmatprep.mubr.f32.mxu0 0.0
  %379 = vmatmul.mubr.f32.gmra.mrb[0].mxu0 %v159
  %v380 = vpop.f32.mrb[0].mxu0
  %v381 = vadd.f32 %v71, %v380
  %v382 = vpop.f32.mrb[0].mxu0
  %383 = vmatprep.mubr.f32.mxu0 0.0
  %384 = vmatmul.mubr.f32.gmra.mrb[0].mxu0 %v162
  %v385 = vpop.f32.mrb[0].mxu0
  %v386 = vadd.f32 %v71, %v385
  %v387 = vpop.f32.mrb[0].mxu0
  %388 = vmatprep.mubr.f32.mxu0 0.0
  %389 = vmatmul.mubr.f32.gmra.mrb[0].mxu0 %v165
  %v390 = vpop.f32.mrb[0].mxu0
  %v391 = vadd.f32 %v71, %v390
  %v392 = vpop.f32.mrb[0].mxu0
  %393 = vmatprep.mubr.f32.mxu0 0.0
  %394 = vmatmul.mubr.f32.gmra.mrb[0].mxu0 %v168
  %v395 = vpop.f32.mrb[0].mxu0
  %v396 = vadd.f32 %v71, %v395
  %v397 = vpop.f32.mrb[0].mxu0
  %398 = vdwg.mxu0
  %v399 = vmax.f32 %v241, 0.0
  %v400 = vmax.f32 %v246, 0.0
  %v401 = vmax.f32 %v251, 0.0
  %v402 = vmax.f32 %v256, 0.0
  %v403 = vmax.f32 %v261, 0.0
  %v404 = vmax.f32 %v266, 0.0
  %v405 = vmax.f32 %v271, 0.0
  %v406 = vmax.f32 %v276, 0.0
  %v407 = vmax.f32 %v281, 0.0
  %v408 = vmax.f32 %v286, 0.0
  %v409 = vmax.f32 %v291, 0.0
  %v410 = vmax.f32 %v296, 0.0
  %v411 = vmax.f32 %v301, 0.0
  %v412 = vmax.f32 %v306, 0.0
  %v413 = vmax.f32 %v311, 0.0
  %v414 = vmax.f32 %v316, 0.0
  %v415 = vmax.f32 %v321, 0.0
  %v416 = vmax.f32 %v326, 0.0
  %v417 = vmax.f32 %v331, 0.0
  %v418 = vmax.f32 %v336, 0.0
  %v419 = vmax.f32 %v341, 0.0
  %v420 = vmax.f32 %v346, 0.0
  %v421 = vmax.f32 %v351, 0.0
  %v422 = vmax.f32 %v356, 0.0
  %v423 = vmax.f32 %v361, 0.0
  %v424 = vmax.f32 %v366, 0.0
  %v425 = vmax.f32 %v371, 0.0
  %v426 = vmax.f32 %v376, 0.0
  %v427 = vmax.f32 %v381, 0.0
  %v428 = vmax.f32 %v386, 0.0
  %v429 = vmax.f32 %v391, 0.0
  %v430 = vmax.f32 %v396, 0.0
  %v431 = vld [vmem:[%s3] sm:$0xff]
  %v432 = vld [vmem:[%s3 + $0x8] sm:$0xff]
  %v433 = vld [vmem:[%s3 + $0x10] sm:$0xff]
  %v434 = vld [vmem:[%s3 + $0x18] sm:$0xff]
  %v435 = vld [vmem:[%s3 + $0x20] sm:$0xff]
  %v436 = vld [vmem:[%s3 + $0x28] sm:$0xff]
  %v437 = vld [vmem:[%s3 + $0x30] sm:$0xff]
  %v438 = vld [vmem:[%s3 + $0x38] sm:$0xff]
  %v439 = vld [vmem:[%s3 + $0x40] sm:$0xff]
  %v440 = vld [vmem:[%s3 + $0x48] sm:$0xff]
  %v441 = vld [vmem:[%s3 + $0x50] sm:$0xff]
  %v442 = vld [vmem:[%s3 + $0x58] sm:$0xff]
  %v443 = vld [vmem:[%s3 + $0x60] sm:$0xff]
  %v444 = vld [vmem:[%s3 + $0x68] sm:$0xff]
  %v445 = vld [vmem:[%s3 + $0x70] sm:$0xff]
  %v446 = vld [vmem:[%s3 + $0x78] sm:$0xff]
  %v447 = vld [vmem:[%s4] sm:$0x1]
  %v449 = vlaneseq
  %v450 = vshrl.u32 %v449, 7
  %v451 = vsub.s32 0, %v450
  %v452 = vrot.slane %v447, %v451
  %454 = vmatprep.subr.mxu0 0.0
  %455 = vmatpush1.msra.mxu0 %v431
  %456 = vmatprep.subr.mxu0 0.0
  %457 = vmatpush1.msra.mxu0 %v432
  %458 = vmatprep.subr.mxu0 0.0
  %459 = vmatpush1.msra.mxu0 %v433
  %460 = vmatprep.subr.mxu0 0.0
  %461 = vmatpush1.msra.mxu0 %v434
  %462 = vmatprep.subr.mxu0 0.0
  %463 = vmatpush1.msra.mxu0 %v435
  %464 = vmatprep.subr.mxu0 0.0
  %465 = vmatpush1.msra.mxu0 %v436
  %466 = vmatprep.subr.mxu0 0.0
  %467 = vmatpush1.msra.mxu0 %v437
  %468 = vmatprep.subr.mxu0 0.0
  %469 = vmatpush1.msra.mxu0 %v438
  %470 = vmatprep.subr.mxu0 0.0
  %471 = vmatpush1.msra.mxu0 %v439
  %472 = vmatprep.subr.mxu0 0.0
  %473 = vmatpush1.msra.mxu0 %v440
  %474 = vmatprep.subr.mxu0 0.0
  %475 = vmatpush1.msra.mxu0 %v441
  %476 = vmatprep.subr.mxu0 0.0
  %477 = vmatpush1.msra.mxu0 %v442
  %478 = vmatprep.subr.mxu0 0.0
  %479 = vmatpush1.msra.mxu0 %v443
  %480 = vmatprep.subr.mxu0 0.0
  %481 = vmatpush1.msra.mxu0 %v444
  %482 = vmatprep.subr.mxu0 0.0
  %483 = vmatpush1.msra.mxu0 %v445
  %484 = vmatprep.subr.mxu0 0.0
  %485 = vmatpush1.msra.mxu0 %v446
  %486 = vmatprep.subr.mxu0 0.0
  %487 = vmatpush1.msra.mxu0 0.0
  %488 = vmatprep.subr.mxu0 0.0
  %489 = vmatpush1.msra.mxu0 0.0
  %490 = vmatprep.subr.mxu0 0.0
  %491 = vmatpush1.msra.mxu0 0.0
  %492 = vmatprep.subr.mxu0 0.0
  %493 = vmatpush1.msra.mxu0 0.0
  %494 = vmatprep.subr.mxu0 0.0
  %495 = vmatpush1.msra.mxu0 0.0
  %496 = vmatprep.subr.mxu0 0.0
  %497 = vmatpush1.msra.mxu0 0.0
  %498 = vmatprep.subr.mxu0 0.0
  %499 = vmatpush1.msra.mxu0 0.0
  %500 = vmatprep.subr.mxu0 0.0
  %501 = vmatpush1.msra.mxu0 0.0
  %502 = vmatprep.subr.mxu0 0.0
  %503 = vmatpush1.msra.mxu0 0.0
  %504 = vmatprep.subr.mxu0 0.0
  %505 = vmatpush1.msra.mxu0 0.0
  %506 = vmatprep.subr.mxu0 0.0
  %507 = vmatpush1.msra.mxu0 0.0
  %508 = vmatprep.subr.mxu0 0.0
  %509 = vmatpush1.msra.mxu0 0.0
  %510 = vmatprep.subr.mxu0 0.0
  %511 = vmatpush1.msra.mxu0 0.0
  %512 = vmatprep.subr.mxu0 0.0
  %513 = vmatpush1.msra.mxu0 0.0
  %514 = vmatprep.subr.mxu0 0.0
  %515 = vmatpush1.msra.mxu0 0.0
  %516 = vmatprep.subr.mxu0 0.0
  %517 = vmatpush1.msra.mxu0 0.0
  %518 = vmatprep.mubr.f32.mxu0 0.0
  %519 = vmatmul.mubr.f32.gmra.mrb[0].mxu0 %v399
  %v520 = vpop.f32.mrb[0].mxu0
  %v521 = vadd.f32 %v452, %v520
  %v522 = vpop.f32.mrb[0].mxu0
  %523 = vmatprep.mubr.f32.mxu0 0.0
  %524 = vmatmul.mubr.f32.gmra.mrb[0].mxu0 %v400
  %v525 = vpop.f32.mrb[0].mxu0
  %v526 = vadd.f32 %v452, %v525
  %v527 = vpop.f32.mrb[0].mxu0
  %528 = vmatprep.mubr.f32.mxu0 0.0
  %529 = vmatmul.mubr.f32.gmra.mrb[0].mxu0 %v401
  %v530 = vpop.f32.mrb[0].mxu0
  %v531 = vadd.f32 %v452, %v530
  %v532 = vpop.f32.mrb[0].mxu0
  %533 = vmatprep.mubr.f32.mxu0 0.0
  %534 = vmatmul.mubr.f32.gmra.mrb[0].mxu0 %v402
  %v535 = vpop.f32.mrb[0].mxu0
  %v536 = vadd.f32 %v452, %v535
  %v537 = vpop.f32.mrb[0].mxu0
  %538 = vmatprep.mubr.f32.mxu0 0.0
  %539 = vmatmul.mubr.f32.gmra.mrb[0].mxu0 %v403
  %v540 = vpop.f32.mrb[0].mxu0
  %v541 = vadd.f32 %v452, %v540
  %v542 = vpop.f32.mrb[0].mxu0
  %543 = vmatprep.mubr.f32.mxu0 0.0
  %544 = vmatmul.mubr.f32.gmra.mrb[0].mxu0 %v404
  %v545 = vpop.f32.mrb[0].mxu0
  %v546 = vadd.f32 %v452, %v545
  %v547 = vpop.f32.mrb[0].mxu0
  %548 = vmatprep.mubr.f32.mxu0 0.0
  %549 = vmatmul.mubr.f32.gmra.mrb[0].mxu0 %v405
  %v550 = vpop.f32.mrb[0].mxu0
  %v551 = vadd.f32 %v452, %v550
  %v552 = vpop.f32.mrb[0].mxu0
  %553 = vmatprep.mubr.f32.mxu0 0.0
  %554 = vmatmul.mubr.f32.gmra.mrb[0].mxu0 %v406
  %v555 = vpop.f32.mrb[0].mxu0
  %v556 = vadd.f32 %v452, %v555
  %v557 = vpop.f32.mrb[0].mxu0
  %558 = vmatprep.mubr.f32.mxu0 0.0
  %559 = vmatmul.mubr.f32.gmra.mrb[0].mxu0 %v407
  %v560 = vpop.f32.mrb[0].mxu0
  %v561 = vadd.f32 %v452, %v560
  %v562 = vpop.f32.mrb[0].mxu0
  %563 = vmatprep.mubr.f32.mxu0 0.0
  %564 = vmatmul.mubr.f32.gmra.mrb[0].mxu0 %v408
  %v565 = vpop.f32.mrb[0].mxu0
  %v566 = vadd.f32 %v452, %v565
  %v567 = vpop.f32.mrb[0].mxu0
  %568 = vmatprep.mubr.f32.mxu0 0.0
  %569 = vmatmul.mubr.f32.gmra.mrb[0].mxu0 %v409
  %v570 = vpop.f32.mrb[0].mxu0
  %v571 = vadd.f32 %v452, %v570
  %v572 = vpop.f32.mrb[0].mxu0
  %573 = vmatprep.mubr.f32.mxu0 0.0
  %574 = vmatmul.mubr.f32.gmra.mrb[0].mxu0 %v410
  %v575 = vpop.f32.mrb[0].mxu0
  %v576 = vadd.f32 %v452, %v575
  %v577 = vpop.f32.mrb[0].mxu0
  %578 = vmatprep.mubr.f32.mxu0 0.0
  %579 = vmatmul.mubr.f32.gmra.mrb[0].mxu0 %v411
  %v580 = vpop.f32.mrb[0].mxu0
  %v581 = vadd.f32 %v452, %v580
  %v582 = vpop.f32.mrb[0].mxu0
  %583 = vmatprep.mubr.f32.mxu0 0.0
  %584 = vmatmul.mubr.f32.gmra.mrb[0].mxu0 %v412
  %v585 = vpop.f32.mrb[0].mxu0
  %v586 = vadd.f32 %v452, %v585
  %v587 = vpop.f32.mrb[0].mxu0
  %588 = vmatprep.mubr.f32.mxu0 0.0
  %589 = vmatmul.mubr.f32.gmra.mrb[0].mxu0 %v413
  %v590 = vpop.f32.mrb[0].mxu0
  %v591 = vadd.f32 %v452, %v590
  %v592 = vpop.f32.mrb[0].mxu0
  %593 = vmatprep.mubr.f32.mxu0 0.0
  %594 = vmatmul.mubr.f32.gmra.mrb[0].mxu0 %v414
  %v595 = vpop.f32.mrb[0].mxu0
  %v596 = vadd.f32 %v452, %v595
  %v597 = vpop.f32.mrb[0].mxu0
  %598 = vmatprep.mubr.f32.mxu0 0.0
  %599 = vmatmul.mubr.f32.gmra.mrb[0].mxu0 %v415
  %v600 = vpop.f32.mrb[0].mxu0
  %v601 = vadd.f32 %v452, %v600
  %v602 = vpop.f32.mrb[0].mxu0
  %603 = vmatprep.mubr.f32.mxu0 0.0
  %604 = vmatmul.mubr.f32.gmra.mrb[0].mxu0 %v416
  %v605 = vpop.f32.mrb[0].mxu0
  %v606 = vadd.f32 %v452, %v605
  %v607 = vpop.f32.mrb[0].mxu0
  %608 = vmatprep.mubr.f32.mxu0 0.0
  %609 = vmatmul.mubr.f32.gmra.mrb[0].mxu0 %v417
  %v610 = vpop.f32.mrb[0].mxu0
  %v611 = vadd.f32 %v452, %v610
  %v612 = vpop.f32.mrb[0].mxu0
  %613 = vmatprep.mubr.f32.mxu0 0.0
  %614 = vmatmul.mubr.f32.gmra.mrb[0].mxu0 %v418
  %v615 = vpop.f32.mrb[0].mxu0
  %v616 = vadd.f32 %v452, %v615
  %v617 = vpop.f32.mrb[0].mxu0
  %618 = vmatprep.mubr.f32.mxu0 0.0
  %619 = vmatmul.mubr.f32.gmra.mrb[0].mxu0 %v419
  %v620 = vpop.f32.mrb[0].mxu0
  %v621 = vadd.f32 %v452, %v620
  %v622 = vpop.f32.mrb[0].mxu0
  %623 = vmatprep.mubr.f32.mxu0 0.0
  %624 = vmatmul.mubr.f32.gmra.mrb[0].mxu0 %v420
  %v625 = vpop.f32.mrb[0].mxu0
  %v626 = vadd.f32 %v452, %v625
  %v627 = vpop.f32.mrb[0].mxu0
  %628 = vmatprep.mubr.f32.mxu0 0.0
  %629 = vmatmul.mubr.f32.gmra.mrb[0].mxu0 %v421
  %v630 = vpop.f32.mrb[0].mxu0
  %v631 = vadd.f32 %v452, %v630
  %v632 = vpop.f32.mrb[0].mxu0
  %633 = vmatprep.mubr.f32.mxu0 0.0
  %634 = vmatmul.mubr.f32.gmra.mrb[0].mxu0 %v422
  %v635 = vpop.f32.mrb[0].mxu0
  %v636 = vadd.f32 %v452, %v635
  %v637 = vpop.f32.mrb[0].mxu0
  %638 = vmatprep.mubr.f32.mxu0 0.0
  %639 = vmatmul.mubr.f32.gmra.mrb[0].mxu0 %v423
  %v640 = vpop.f32.mrb[0].mxu0
  %v641 = vadd.f32 %v452, %v640
  %v642 = vpop.f32.mrb[0].mxu0
  %643 = vmatprep.mubr.f32.mxu0 0.0
  %644 = vmatmul.mubr.f32.gmra.mrb[0].mxu0 %v424
  %v645 = vpop.f32.mrb[0].mxu0
  %v646 = vadd.f32 %v452, %v645
  %v647 = vpop.f32.mrb[0].mxu0
  %648 = vmatprep.mubr.f32.mxu0 0.0
  %649 = vmatmul.mubr.f32.gmra.mrb[0].mxu0 %v425
  %v650 = vpop.f32.mrb[0].mxu0
  %v651 = vadd.f32 %v452, %v650
  %v652 = vpop.f32.mrb[0].mxu0
  %653 = vmatprep.mubr.f32.mxu0 0.0
  %654 = vmatmul.mubr.f32.gmra.mrb[0].mxu0 %v426
  %v655 = vpop.f32.mrb[0].mxu0
  %v656 = vadd.f32 %v452, %v655
  %v657 = vpop.f32.mrb[0].mxu0
  %658 = vmatprep.mubr.f32.mxu0 0.0
  %659 = vmatmul.mubr.f32.gmra.mrb[0].mxu0 %v427
  %v660 = vpop.f32.mrb[0].mxu0
  %v661 = vadd.f32 %v452, %v660
  %v662 = vpop.f32.mrb[0].mxu0
  %663 = vmatprep.mubr.f32.mxu0 0.0
  %664 = vmatmul.mubr.f32.gmra.mrb[0].mxu0 %v428
  %v665 = vpop.f32.mrb[0].mxu0
  %v666 = vadd.f32 %v452, %v665
  %v667 = vpop.f32.mrb[0].mxu0
  %668 = vmatprep.mubr.f32.mxu0 0.0
  %669 = vmatmul.mubr.f32.gmra.mrb[0].mxu0 %v429
  %v670 = vpop.f32.mrb[0].mxu0
  %v671 = vadd.f32 %v452, %v670
  %v672 = vpop.f32.mrb[0].mxu0
  %673 = vmatprep.mubr.f32.mxu0 0.0
  %674 = vmatmul.mubr.f32.gmra.mrb[0].mxu0 %v430
  %v675 = vpop.f32.mrb[0].mxu0
  %v676 = vadd.f32 %v452, %v675
  %v677 = vpop.f32.mrb[0].mxu0
  %678 = vdwg.mxu0
  %v679 = vmax.f32 %v521, 0.0
  %v680 = vmax.f32 %v526, 0.0
  %v681 = vmax.f32 %v531, 0.0
  %v682 = vmax.f32 %v536, 0.0
  %v683 = vmax.f32 %v541, 0.0
  %v684 = vmax.f32 %v546, 0.0
  %v685 = vmax.f32 %v551, 0.0
  %v686 = vmax.f32 %v556, 0.0
  %v687 = vmax.f32 %v561, 0.0
  %v688 = vmax.f32 %v566, 0.0
  %v689 = vmax.f32 %v571, 0.0
  %v690 = vmax.f32 %v576, 0.0
  %v691 = vmax.f32 %v581, 0.0
  %v692 = vmax.f32 %v586, 0.0
  %v693 = vmax.f32 %v591, 0.0
  %v694 = vmax.f32 %v596, 0.0
  %v695 = vmax.f32 %v601, 0.0
  %v696 = vmax.f32 %v606, 0.0
  %v697 = vmax.f32 %v611, 0.0
  %v698 = vmax.f32 %v616, 0.0
  %v699 = vmax.f32 %v621, 0.0
  %v700 = vmax.f32 %v626, 0.0
  %v701 = vmax.f32 %v631, 0.0
  %v702 = vmax.f32 %v636, 0.0
  %v703 = vmax.f32 %v641, 0.0
  %v704 = vmax.f32 %v646, 0.0
  %v705 = vmax.f32 %v651, 0.0
  %v706 = vmax.f32 %v656, 0.0
  %v707 = vmax.f32 %v661, 0.0
  %v708 = vmax.f32 %v666, 0.0
  %v709 = vmax.f32 %v671, 0.0
  %v710 = vmax.f32 %v676, 0.0
  %v711 = vld [vmem:[%s5] sm:$0xff]
  %v712 = vld [vmem:[%s5 + $0x8] sm:$0xff]
  %v713 = vld [vmem:[%s5 + $0x10] sm:$0xff]
  %v714 = vld [vmem:[%s5 + $0x18] sm:$0xff]
  %v715 = vld [vmem:[%s5 + $0x20] sm:$0xff]
  %v716 = vld [vmem:[%s5 + $0x28] sm:$0xff]
  %v717 = vld [vmem:[%s5 + $0x30] sm:$0xff]
  %v718 = vld [vmem:[%s5 + $0x38] sm:$0xff]
  %v719 = vld [vmem:[%s5 + $0x40] sm:$0xff]
  %v720 = vld [vmem:[%s5 + $0x48] sm:$0xff]
  %v721 = vld [vmem:[%s5 + $0x50] sm:$0xff]
  %v722 = vld [vmem:[%s5 + $0x58] sm:$0xff]
  %v723 = vld [vmem:[%s5 + $0x60] sm:$0xff]
  %v724 = vld [vmem:[%s5 + $0x68] sm:$0xff]
  %v725 = vld [vmem:[%s5 + $0x70] sm:$0xff]
  %v726 = vld [vmem:[%s5 + $0x78] sm:$0xff]
  %v727 = vld [vmem:[%s6] sm:$0x1]
  %v729 = vlaneseq
  %v730 = vshrl.u32 %v729, 7
  %v731 = vsub.s32 0, %v730
  %v732 = vrot.slane %v727, %v731
  %734 = vmatprep.subr.mxu0 0.0
  %735 = vmatpush1.msra.mxu0 %v711
  %736 = vmatprep.subr.mxu0 0.0
  %737 = vmatpush1.msra.mxu0 %v712
  %738 = vmatprep.subr.mxu0 0.0
  %739 = vmatpush1.msra.mxu0 %v713
  %740 = vmatprep.subr.mxu0 0.0
  %741 = vmatpush1.msra.mxu0 %v714
  %742 = vmatprep.subr.mxu0 0.0
  %743 = vmatpush1.msra.mxu0 %v715
  %744 = vmatprep.subr.mxu0 0.0
  %745 = vmatpush1.msra.mxu0 %v716
  %746 = vmatprep.subr.mxu0 0.0
  %747 = vmatpush1.msra.mxu0 %v717
  %748 = vmatprep.subr.mxu0 0.0
  %749 = vmatpush1.msra.mxu0 %v718
  %750 = vmatprep.subr.mxu0 0.0
  %751 = vmatpush1.msra.mxu0 %v719
  %752 = vmatprep.subr.mxu0 0.0
  %753 = vmatpush1.msra.mxu0 %v720
  %754 = vmatprep.subr.mxu0 0.0
  %755 = vmatpush1.msra.mxu0 %v721
  %756 = vmatprep.subr.mxu0 0.0
  %757 = vmatpush1.msra.mxu0 %v722
  %758 = vmatprep.subr.mxu0 0.0
  %759 = vmatpush1.msra.mxu0 %v723
  %760 = vmatprep.subr.mxu0 0.0
  %761 = vmatpush1.msra.mxu0 %v724
  %762 = vmatprep.subr.mxu0 0.0
  %763 = vmatpush1.msra.mxu0 %v725
  %764 = vmatprep.subr.mxu0 0.0
  %765 = vmatpush1.msra.mxu0 %v726
  %766 = vmatprep.subr.mxu0 0.0
  %767 = vmatpush1.msra.mxu0 0.0
  %768 = vmatprep.subr.mxu0 0.0
  %769 = vmatpush1.msra.mxu0 0.0
  %770 = vmatprep.subr.mxu0 0.0
  %771 = vmatpush1.msra.mxu0 0.0
  %772 = vmatprep.subr.mxu0 0.0
  %773 = vmatpush1.msra.mxu0 0.0
  %774 = vmatprep.subr.mxu0 0.0
  %775 = vmatpush1.msra.mxu0 0.0
  %776 = vmatprep.subr.mxu0 0.0
  %777 = vmatpush1.msra.mxu0 0.0
  %778 = vmatprep.subr.mxu0 0.0
  %779 = vmatpush1.msra.mxu0 0.0
  %780 = vmatprep.subr.mxu0 0.0
  %781 = vmatpush1.msra.mxu0 0.0
  %782 = vmatprep.subr.mxu0 0.0
  %783 = vmatpush1.msra.mxu0 0.0
  %784 = vmatprep.subr.mxu0 0.0
  %785 = vmatpush1.msra.mxu0 0.0
  %786 = vmatprep.subr.mxu0 0.0
  %787 = vmatpush1.msra.mxu0 0.0
  %788 = vmatprep.subr.mxu0 0.0
  %789 = vmatpush1.msra.mxu0 0.0
  %790 = vmatprep.subr.mxu0 0.0
  %791 = vmatpush1.msra.mxu0 0.0
  %792 = vmatprep.subr.mxu0 0.0
  %793 = vmatpush1.msra.mxu0 0.0
  %794 = vmatprep.subr.mxu0 0.0
  %795 = vmatpush1.msra.mxu0 0.0
  %796 = vmatprep.subr.mxu0 0.0
  %797 = vmatpush1.msra.mxu0 0.0
  %798 = vmatprep.mubr.f32.mxu0 0.0
  %799 = vmatmul.mubr.f32.gmra.mrb[0].mxu0 %v679
  %v800 = vpop.f32.mrb[0].mxu0
  %v801 = vadd.f32 %v732, %v800
  %v802 = vpop.f32.mrb[0].mxu0
  %803 = vmatprep.mubr.f32.mxu0 0.0
  %804 = vmatmul.mubr.f32.gmra.mrb[0].mxu0 %v680
  %v805 = vpop.f32.mrb[0].mxu0
  %v806 = vadd.f32 %v732, %v805
  %v807 = vpop.f32.mrb[0].mxu0
  %808 = vmatprep.mubr.f32.mxu0 0.0
  %809 = vmatmul.mubr.f32.gmra.mrb[0].mxu0 %v681
  %v810 = vpop.f32.mrb[0].mxu0
  %v811 = vadd.f32 %v732, %v810
  %v812 = vpop.f32.mrb[0].mxu0
  %813 = vmatprep.mubr.f32.mxu0 0.0
  %814 = vmatmul.mubr.f32.gmra.mrb[0].mxu0 %v682
  %v815 = vpop.f32.mrb[0].mxu0
  %v816 = vadd.f32 %v732, %v815
  %v817 = vpop.f32.mrb[0].mxu0
  %818 = vmatprep.mubr.f32.mxu0 0.0
  %819 = vmatmul.mubr.f32.gmra.mrb[0].mxu0 %v683
  %v820 = vpop.f32.mrb[0].mxu0
  %v821 = vadd.f32 %v732, %v820
  %v822 = vpop.f32.mrb[0].mxu0
  %823 = vmatprep.mubr.f32.mxu0 0.0
  %824 = vmatmul.mubr.f32.gmra.mrb[0].mxu0 %v684
  %v825 = vpop.f32.mrb[0].mxu0
  %v826 = vadd.f32 %v732, %v825
  %v827 = vpop.f32.mrb[0].mxu0
  %828 = vmatprep.mubr.f32.mxu0 0.0
  %829 = vmatmul.mubr.f32.gmra.mrb[0].mxu0 %v685
  %v830 = vpop.f32.mrb[0].mxu0
  %v831 = vadd.f32 %v732, %v830
  %v832 = vpop.f32.mrb[0].mxu0
  %833 = vmatprep.mubr.f32.mxu0 0.0
  %834 = vmatmul.mubr.f32.gmra.mrb[0].mxu0 %v686
  %v835 = vpop.f32.mrb[0].mxu0
  %v836 = vadd.f32 %v732, %v835
  %v837 = vpop.f32.mrb[0].mxu0
  %838 = vmatprep.mubr.f32.mxu0 0.0
  %839 = vmatmul.mubr.f32.gmra.mrb[0].mxu0 %v687
  %v840 = vpop.f32.mrb[0].mxu0
  %v841 = vadd.f32 %v732, %v840
  %v842 = vpop.f32.mrb[0].mxu0
  %843 = vmatprep.mubr.f32.mxu0 0.0
  %844 = vmatmul.mubr.f32.gmra.mrb[0].mxu0 %v688
  %v845 = vpop.f32.mrb[0].mxu0
  %v846 = vadd.f32 %v732, %v845
  %v847 = vpop.f32.mrb[0].mxu0
  %848 = vmatprep.mubr.f32.mxu0 0.0
  %849 = vmatmul.mubr.f32.gmra.mrb[0].mxu0 %v689
  %v850 = vpop.f32.mrb[0].mxu0
  %v851 = vadd.f32 %v732, %v850
  %v852 = vpop.f32.mrb[0].mxu0
  %853 = vmatprep.mubr.f32.mxu0 0.0
  %854 = vmatmul.mubr.f32.gmra.mrb[0].mxu0 %v690
  %v855 = vpop.f32.mrb[0].mxu0
  %v856 = vadd.f32 %v732, %v855
  %v857 = vpop.f32.mrb[0].mxu0
  %858 = vmatprep.mubr.f32.mxu0 0.0
  %859 = vmatmul.mubr.f32.gmra.mrb[0].mxu0 %v691
  %v860 = vpop.f32.mrb[0].mxu0
  %v861 = vadd.f32 %v732, %v860
  %v862 = vpop.f32.mrb[0].mxu0
  %863 = vmatprep.mubr.f32.mxu0 0.0
  %864 = vmatmul.mubr.f32.gmra.mrb[0].mxu0 %v692
  %v865 = vpop.f32.mrb[0].mxu0
  %v866 = vadd.f32 %v732, %v865
  %v867 = vpop.f32.mrb[0].mxu0
  %868 = vmatprep.mubr.f32.mxu0 0.0
  %869 = vmatmul.mubr.f32.gmra.mrb[0].mxu0 %v693
  %v870 = vpop.f32.mrb[0].mxu0
  %v871 = vadd.f32 %v732, %v870
  %v872 = vpop.f32.mrb[0].mxu0
  %873 = vmatprep.mubr.f32.mxu0 0.0
  %874 = vmatmul.mubr.f32.gmra.mrb[0].mxu0 %v694
  %v875 = vpop.f32.mrb[0].mxu0
  %v876 = vadd.f32 %v732, %v875
  %v877 = vpop.f32.mrb[0].mxu0
  %878 = vmatprep.mubr.f32.mxu0 0.0
  %879 = vmatmul.mubr.f32.gmra.mrb[0].mxu0 %v695
  %v880 = vpop.f32.mrb[0].mxu0
  %v881 = vadd.f32 %v732, %v880
  %v882 = vpop.f32.mrb[0].mxu0
  %883 = vmatprep.mubr.f32.mxu0 0.0
  %884 = vmatmul.mubr.f32.gmra.mrb[0].mxu0 %v696
  %v885 = vpop.f32.mrb[0].mxu0
  %v886 = vadd.f32 %v732, %v885
  %v887 = vpop.f32.mrb[0].mxu0
  %888 = vmatprep.mubr.f32.mxu0 0.0
  %889 = vmatmul.mubr.f32.gmra.mrb[0].mxu0 %v697
  %v890 = vpop.f32.mrb[0].mxu0
  %v891 = vadd.f32 %v732, %v890
  %v892 = vpop.f32.mrb[0].mxu0
  %893 = vmatprep.mubr.f32.mxu0 0.0
  %894 = vmatmul.mubr.f32.gmra.mrb[0].mxu0 %v698
  %v895 = vpop.f32.mrb[0].mxu0
  %v896 = vadd.f32 %v732, %v895
  %v897 = vpop.f32.mrb[0].mxu0
  %898 = vmatprep.mubr.f32.mxu0 0.0
  %899 = vmatmul.mubr.f32.gmra.mrb[0].mxu0 %v699
  %v900 = vpop.f32.mrb[0].mxu0
  %v901 = vadd.f32 %v732, %v900
  %v902 = vpop.f32.mrb[0].mxu0
  %903 = vmatprep.mubr.f32.mxu0 0.0
  %904 = vmatmul.mubr.f32.gmra.mrb[0].mxu0 %v700
  %v905 = vpop.f32.mrb[0].mxu0
  %v906 = vadd.f32 %v732, %v905
  %v907 = vpop.f32.mrb[0].mxu0
  %908 = vmatprep.mubr.f32.mxu0 0.0
  %909 = vmatmul.mubr.f32.gmra.mrb[0].mxu0 %v701
  %v910 = vpop.f32.mrb[0].mxu0
  %v911 = vadd.f32 %v732, %v910
  %v912 = vpop.f32.mrb[0].mxu0
  %913 = vmatprep.mubr.f32.mxu0 0.0
  %914 = vmatmul.mubr.f32.gmra.mrb[0].mxu0 %v702
  %v915 = vpop.f32.mrb[0].mxu0
  %v916 = vadd.f32 %v732, %v915
  %v917 = vpop.f32.mrb[0].mxu0
  %918 = vmatprep.mubr.f32.mxu0 0.0
  %919 = vmatmul.mubr.f32.gmra.mrb[0].mxu0 %v703
  %v920 = vpop.f32.mrb[0].mxu0
  %v921 = vadd.f32 %v732, %v920
  %v922 = vpop.f32.mrb[0].mxu0
  %923 = vmatprep.mubr.f32.mxu0 0.0
  %924 = vmatmul.mubr.f32.gmra.mrb[0].mxu0 %v704
  %v925 = vpop.f32.mrb[0].mxu0
  %v926 = vadd.f32 %v732, %v925
  %v927 = vpop.f32.mrb[0].mxu0
  %928 = vmatprep.mubr.f32.mxu0 0.0
  %929 = vmatmul.mubr.f32.gmra.mrb[0].mxu0 %v705
  %v930 = vpop.f32.mrb[0].mxu0
  %v931 = vadd.f32 %v732, %v930
  %v932 = vpop.f32.mrb[0].mxu0
  %933 = vmatprep.mubr.f32.mxu0 0.0
  %934 = vmatmul.mubr.f32.gmra.mrb[0].mxu0 %v706
  %v935 = vpop.f32.mrb[0].mxu0
  %v936 = vadd.f32 %v732, %v935
  %v937 = vpop.f32.mrb[0].mxu0
  %938 = vmatprep.mubr.f32.mxu0 0.0
  %939 = vmatmul.mubr.f32.gmra.mrb[0].mxu0 %v707
  %v940 = vpop.f32.mrb[0].mxu0
  %v941 = vadd.f32 %v732, %v940
  %v942 = vpop.f32.mrb[0].mxu0
  %943 = vmatprep.mubr.f32.mxu0 0.0
  %944 = vmatmul.mubr.f32.gmra.mrb[0].mxu0 %v708
  %v945 = vpop.f32.mrb[0].mxu0
  %v946 = vadd.f32 %v732, %v945
  %v947 = vpop.f32.mrb[0].mxu0
  %948 = vmatprep.mubr.f32.mxu0 0.0
  %949 = vmatmul.mubr.f32.gmra.mrb[0].mxu0 %v709
  %v950 = vpop.f32.mrb[0].mxu0
  %v951 = vadd.f32 %v732, %v950
  %v952 = vpop.f32.mrb[0].mxu0
  %953 = vmatprep.mubr.f32.mxu0 0.0
  %954 = vmatmul.mubr.f32.gmra.mrb[0].mxu0 %v710
  %v955 = vpop.f32.mrb[0].mxu0
  %v956 = vadd.f32 %v732, %v955
  %v957 = vpop.f32.mrb[0].mxu0
  %958 = vdwg.mxu0
  %v959 = vmax.f32 %v801, 0.0
  %v960 = vmax.f32 %v806, 0.0
  %v961 = vmax.f32 %v811, 0.0
  %v962 = vmax.f32 %v816, 0.0
  %v963 = vmax.f32 %v821, 0.0
  %v964 = vmax.f32 %v826, 0.0
  %v965 = vmax.f32 %v831, 0.0
  %v966 = vmax.f32 %v836, 0.0
  %v967 = vmax.f32 %v841, 0.0
  %v968 = vmax.f32 %v846, 0.0
  %v969 = vmax.f32 %v851, 0.0
  %v970 = vmax.f32 %v856, 0.0
  %v971 = vmax.f32 %v861, 0.0
  %v972 = vmax.f32 %v866, 0.0
  %v973 = vmax.f32 %v871, 0.0
  %v974 = vmax.f32 %v876, 0.0
  %v975 = vmax.f32 %v881, 0.0
  %v976 = vmax.f32 %v886, 0.0
  %v977 = vmax.f32 %v891, 0.0
  %v978 = vmax.f32 %v896, 0.0
  %v979 = vmax.f32 %v901, 0.0
  %v980 = vmax.f32 %v906, 0.0
  %v981 = vmax.f32 %v911, 0.0
  %v982 = vmax.f32 %v916, 0.0
  %v983 = vmax.f32 %v921, 0.0
  %v984 = vmax.f32 %v926, 0.0
  %v985 = vmax.f32 %v931, 0.0
  %v986 = vmax.f32 %v936, 0.0
  %v987 = vmax.f32 %v941, 0.0
  %v988 = vmax.f32 %v946, 0.0
  %v989 = vmax.f32 %v951, 0.0
  %v990 = vmax.f32 %v956, 0.0
  %v991 = vld [vmem:[%s7] sm:$0xff]
  %v992 = vld [vmem:[%s7 + $0x8] sm:$0xff]
  %v993 = vld [vmem:[%s7 + $0x10] sm:$0xff]
  %v994 = vld [vmem:[%s7 + $0x18] sm:$0xff]
  %v995 = vld [vmem:[%s7 + $0x20] sm:$0xff]
  %v996 = vld [vmem:[%s7 + $0x28] sm:$0xff]
  %v997 = vld [vmem:[%s7 + $0x30] sm:$0xff]
  %v998 = vld [vmem:[%s7 + $0x38] sm:$0xff]
  %v999 = vld [vmem:[%s7 + $0x40] sm:$0xff]
  %v1000 = vld [vmem:[%s7 + $0x48] sm:$0xff]
  %v1001 = vld [vmem:[%s7 + $0x50] sm:$0xff]
  %v1002 = vld [vmem:[%s7 + $0x58] sm:$0xff]
  %v1003 = vld [vmem:[%s7 + $0x60] sm:$0xff]
  %v1004 = vld [vmem:[%s7 + $0x68] sm:$0xff]
  %v1005 = vld [vmem:[%s7 + $0x70] sm:$0xff]
  %v1006 = vld [vmem:[%s7 + $0x78] sm:$0xff]
  %v1007 = vld [vmem:[%s8] sm:$0x1]
  %v1009 = vlaneseq
  %v1010 = vshrl.u32 %v1009, 7
  %v1011 = vsub.s32 0, %v1010
  %v1012 = vrot.slane %v1007, %v1011
  %1014 = vmatprep.subr.mxu0 0.0
  %1015 = vmatpush1.msra.mxu0 %v991
  %1016 = vmatprep.subr.mxu0 0.0
  %1017 = vmatpush1.msra.mxu0 %v992
  %1018 = vmatprep.subr.mxu0 0.0
  %1019 = vmatpush1.msra.mxu0 %v993
  %1020 = vmatprep.subr.mxu0 0.0
  %1021 = vmatpush1.msra.mxu0 %v994
  %1022 = vmatprep.subr.mxu0 0.0
  %1023 = vmatpush1.msra.mxu0 %v995
  %1024 = vmatprep.subr.mxu0 0.0
  %1025 = vmatpush1.msra.mxu0 %v996
  %1026 = vmatprep.subr.mxu0 0.0
  %1027 = vmatpush1.msra.mxu0 %v997
  %1028 = vmatprep.subr.mxu0 0.0
  %1029 = vmatpush1.msra.mxu0 %v998
  %1030 = vmatprep.subr.mxu0 0.0
  %1031 = vmatpush1.msra.mxu0 %v999
  %1032 = vmatprep.subr.mxu0 0.0
  %1033 = vmatpush1.msra.mxu0 %v1000
  %1034 = vmatprep.subr.mxu0 0.0
  %1035 = vmatpush1.msra.mxu0 %v1001
  %1036 = vmatprep.subr.mxu0 0.0
  %1037 = vmatpush1.msra.mxu0 %v1002
  %1038 = vmatprep.subr.mxu0 0.0
  %1039 = vmatpush1.msra.mxu0 %v1003
  %1040 = vmatprep.subr.mxu0 0.0
  %1041 = vmatpush1.msra.mxu0 %v1004
  %1042 = vmatprep.subr.mxu0 0.0
  %1043 = vmatpush1.msra.mxu0 %v1005
  %1044 = vmatprep.subr.mxu0 0.0
  %1045 = vmatpush1.msra.mxu0 %v1006
  %1046 = vmatprep.subr.mxu0 0.0
  %1047 = vmatpush1.msra.mxu0 0.0
  %1048 = vmatprep.subr.mxu0 0.0
  %1049 = vmatpush1.msra.mxu0 0.0
  %1050 = vmatprep.subr.mxu0 0.0
  %1051 = vmatpush1.msra.mxu0 0.0
  %1052 = vmatprep.subr.mxu0 0.0
  %1053 = vmatpush1.msra.mxu0 0.0
  %1054 = vmatprep.subr.mxu0 0.0
  %1055 = vmatpush1.msra.mxu0 0.0
  %1056 = vmatprep.subr.mxu0 0.0
  %1057 = vmatpush1.msra.mxu0 0.0
  %1058 = vmatprep.subr.mxu0 0.0
  %1059 = vmatpush1.msra.mxu0 0.0
  %1060 = vmatprep.subr.mxu0 0.0
  %1061 = vmatpush1.msra.mxu0 0.0
  %1062 = vmatprep.subr.mxu0 0.0
  %1063 = vmatpush1.msra.mxu0 0.0
  %1064 = vmatprep.subr.mxu0 0.0
  %1065 = vmatpush1.msra.mxu0 0.0
  %1066 = vmatprep.subr.mxu0 0.0
  %1067 = vmatpush1.msra.mxu0 0.0
  %1068 = vmatprep.subr.mxu0 0.0
  %1069 = vmatpush1.msra.mxu0 0.0
  %1070 = vmatprep.subr.mxu0 0.0
  %1071 = vmatpush1.msra.mxu0 0.0
  %1072 = vmatprep.subr.mxu0 0.0
  %1073 = vmatpush1.msra.mxu0 0.0
  %1074 = vmatprep.subr.mxu0 0.0
  %1075 = vmatpush1.msra.mxu0 0.0
  %1076 = vmatprep.subr.mxu0 0.0
  %1077 = vmatpush1.msra.mxu0 0.0
  %1078 = vmatprep.mubr.f32.mxu0 0.0
  %1079 = vmatmul.mubr.f32.gmra.mrb[0].mxu0 %v959
  %v1080 = vpop.f32.mrb[0].mxu0
  %v1081 = vadd.f32 %v1012, %v1080
  %v1082 = vpop.f32.mrb[0].mxu0
  %1083 = vmatprep.mubr.f32.mxu0 0.0
  %1084 = vmatmul.mubr.f32.gmra.mrb[0].mxu0 %v960
  %v1085 = vpop.f32.mrb[0].mxu0
  %v1086 = vadd.f32 %v1012, %v1085
  %v1087 = vpop.f32.mrb[0].mxu0
  %1088 = vmatprep.mubr.f32.mxu0 0.0
  %1089 = vmatmul.mubr.f32.gmra.mrb[0].mxu0 %v961
  %v1090 = vpop.f32.mrb[0].mxu0
  %v1091 = vadd.f32 %v1012, %v1090
  %v1092 = vpop.f32.mrb[0].mxu0
  %1093 = vmatprep.mubr.f32.mxu0 0.0
  %1094 = vmatmul.mubr.f32.gmra.mrb[0].mxu0 %v962
  %v1095 = vpop.f32.mrb[0].mxu0
  %v1096 = vadd.f32 %v1012, %v1095
  %v1097 = vpop.f32.mrb[0].mxu0
  %1098 = vmatprep.mubr.f32.mxu0 0.0
  %1099 = vmatmul.mubr.f32.gmra.mrb[0].mxu0 %v963
  %v1100 = vpop.f32.mrb[0].mxu0
  %v1101 = vadd.f32 %v1012, %v1100
  %v1102 = vpop.f32.mrb[0].mxu0
  %1103 = vmatprep.mubr.f32.mxu0 0.0
  %1104 = vmatmul.mubr.f32.gmra.mrb[0].mxu0 %v964
  %v1105 = vpop.f32.mrb[0].mxu0
  %v1106 = vadd.f32 %v1012, %v1105
  %v1107 = vpop.f32.mrb[0].mxu0
  %1108 = vmatprep.mubr.f32.mxu0 0.0
  %1109 = vmatmul.mubr.f32.gmra.mrb[0].mxu0 %v965
  %v1110 = vpop.f32.mrb[0].mxu0
  %v1111 = vadd.f32 %v1012, %v1110
  %v1112 = vpop.f32.mrb[0].mxu0
  %1113 = vmatprep.mubr.f32.mxu0 0.0
  %1114 = vmatmul.mubr.f32.gmra.mrb[0].mxu0 %v966
  %v1115 = vpop.f32.mrb[0].mxu0
  %v1116 = vadd.f32 %v1012, %v1115
  %v1117 = vpop.f32.mrb[0].mxu0
  %1118 = vmatprep.mubr.f32.mxu0 0.0
  %1119 = vmatmul.mubr.f32.gmra.mrb[0].mxu0 %v967
  %v1120 = vpop.f32.mrb[0].mxu0
  %v1121 = vadd.f32 %v1012, %v1120
  %v1122 = vpop.f32.mrb[0].mxu0
  %1123 = vmatprep.mubr.f32.mxu0 0.0
  %1124 = vmatmul.mubr.f32.gmra.mrb[0].mxu0 %v968
  %v1125 = vpop.f32.mrb[0].mxu0
  %v1126 = vadd.f32 %v1012, %v1125
  %v1127 = vpop.f32.mrb[0].mxu0
  %1128 = vmatprep.mubr.f32.mxu0 0.0
  %1129 = vmatmul.mubr.f32.gmra.mrb[0].mxu0 %v969
  %v1130 = vpop.f32.mrb[0].mxu0
  %v1131 = vadd.f32 %v1012, %v1130
  %v1132 = vpop.f32.mrb[0].mxu0
  %1133 = vmatprep.mubr.f32.mxu0 0.0
  %1134 = vmatmul.mubr.f32.gmra.mrb[0].mxu0 %v970
  %v1135 = vpop.f32.mrb[0].mxu0
  %v1136 = vadd.f32 %v1012, %v1135
  %v1137 = vpop.f32.mrb[0].mxu0
  %1138 = vmatprep.mubr.f32.mxu0 0.0
  %1139 = vmatmul.mubr.f32.gmra.mrb[0].mxu0 %v971
  %v1140 = vpop.f32.mrb[0].mxu0
  %v1141 = vadd.f32 %v1012, %v1140
  %v1142 = vpop.f32.mrb[0].mxu0
  %1143 = vmatprep.mubr.f32.mxu0 0.0
  %1144 = vmatmul.mubr.f32.gmra.mrb[0].mxu0 %v972
  %v1145 = vpop.f32.mrb[0].mxu0
  %v1146 = vadd.f32 %v1012, %v1145
  %v1147 = vpop.f32.mrb[0].mxu0
  %1148 = vmatprep.mubr.f32.mxu0 0.0
  %1149 = vmatmul.mubr.f32.gmra.mrb[0].mxu0 %v973
  %v1150 = vpop.f32.mrb[0].mxu0
  %v1151 = vadd.f32 %v1012, %v1150
  %v1152 = vpop.f32.mrb[0].mxu0
  %1153 = vmatprep.mubr.f32.mxu0 0.0
  %1154 = vmatmul.mubr.f32.gmra.mrb[0].mxu0 %v974
  %v1155 = vpop.f32.mrb[0].mxu0
  %v1156 = vadd.f32 %v1012, %v1155
  %v1157 = vpop.f32.mrb[0].mxu0
  %1158 = vmatprep.mubr.f32.mxu0 0.0
  %1159 = vmatmul.mubr.f32.gmra.mrb[0].mxu0 %v975
  %v1160 = vpop.f32.mrb[0].mxu0
  %v1161 = vadd.f32 %v1012, %v1160
  %v1162 = vpop.f32.mrb[0].mxu0
  %1163 = vmatprep.mubr.f32.mxu0 0.0
  %1164 = vmatmul.mubr.f32.gmra.mrb[0].mxu0 %v976
  %v1165 = vpop.f32.mrb[0].mxu0
  %v1166 = vadd.f32 %v1012, %v1165
  %v1167 = vpop.f32.mrb[0].mxu0
  %1168 = vmatprep.mubr.f32.mxu0 0.0
  %1169 = vmatmul.mubr.f32.gmra.mrb[0].mxu0 %v977
  %v1170 = vpop.f32.mrb[0].mxu0
  %v1171 = vadd.f32 %v1012, %v1170
  %v1172 = vpop.f32.mrb[0].mxu0
  %1173 = vmatprep.mubr.f32.mxu0 0.0
  %1174 = vmatmul.mubr.f32.gmra.mrb[0].mxu0 %v978
  %v1175 = vpop.f32.mrb[0].mxu0
  %v1176 = vadd.f32 %v1012, %v1175
  %v1177 = vpop.f32.mrb[0].mxu0
  %1178 = vmatprep.mubr.f32.mxu0 0.0
  %1179 = vmatmul.mubr.f32.gmra.mrb[0].mxu0 %v979
  %v1180 = vpop.f32.mrb[0].mxu0
  %v1181 = vadd.f32 %v1012, %v1180
  %v1182 = vpop.f32.mrb[0].mxu0
  %1183 = vmatprep.mubr.f32.mxu0 0.0
  %1184 = vmatmul.mubr.f32.gmra.mrb[0].mxu0 %v980
  %v1185 = vpop.f32.mrb[0].mxu0
  %v1186 = vadd.f32 %v1012, %v1185
  %v1187 = vpop.f32.mrb[0].mxu0
  %1188 = vmatprep.mubr.f32.mxu0 0.0
  %1189 = vmatmul.mubr.f32.gmra.mrb[0].mxu0 %v981
  %v1190 = vpop.f32.mrb[0].mxu0
  %v1191 = vadd.f32 %v1012, %v1190
  %v1192 = vpop.f32.mrb[0].mxu0
  %1193 = vmatprep.mubr.f32.mxu0 0.0
  %1194 = vmatmul.mubr.f32.gmra.mrb[0].mxu0 %v982
  %v1195 = vpop.f32.mrb[0].mxu0
  %v1196 = vadd.f32 %v1012, %v1195
  %v1197 = vpop.f32.mrb[0].mxu0
  %1198 = vmatprep.mubr.f32.mxu0 0.0
  %1199 = vmatmul.mubr.f32.gmra.mrb[0].mxu0 %v983
  %v1200 = vpop.f32.mrb[0].mxu0
  %v1201 = vadd.f32 %v1012, %v1200
  %v1202 = vpop.f32.mrb[0].mxu0
  %1203 = vmatprep.mubr.f32.mxu0 0.0
  %1204 = vmatmul.mubr.f32.gmra.mrb[0].mxu0 %v984
  %v1205 = vpop.f32.mrb[0].mxu0
  %v1206 = vadd.f32 %v1012, %v1205
  %v1207 = vpop.f32.mrb[0].mxu0
  %1208 = vmatprep.mubr.f32.mxu0 0.0
  %1209 = vmatmul.mubr.f32.gmra.mrb[0].mxu0 %v985
  %v1210 = vpop.f32.mrb[0].mxu0
  %v1211 = vadd.f32 %v1012, %v1210
  %v1212 = vpop.f32.mrb[0].mxu0
  %1213 = vmatprep.mubr.f32.mxu0 0.0
  %1214 = vmatmul.mubr.f32.gmra.mrb[0].mxu0 %v986
  %v1215 = vpop.f32.mrb[0].mxu0
  %v1216 = vadd.f32 %v1012, %v1215
  %v1217 = vpop.f32.mrb[0].mxu0
  %1218 = vmatprep.mubr.f32.mxu0 0.0
  %1219 = vmatmul.mubr.f32.gmra.mrb[0].mxu0 %v987
  %v1220 = vpop.f32.mrb[0].mxu0
  %v1221 = vadd.f32 %v1012, %v1220
  %v1222 = vpop.f32.mrb[0].mxu0
  %1223 = vmatprep.mubr.f32.mxu0 0.0
  %1224 = vmatmul.mubr.f32.gmra.mrb[0].mxu0 %v988
  %v1225 = vpop.f32.mrb[0].mxu0
  %v1226 = vadd.f32 %v1012, %v1225
  %v1227 = vpop.f32.mrb[0].mxu0
  %1228 = vmatprep.mubr.f32.mxu0 0.0
  %1229 = vmatmul.mubr.f32.gmra.mrb[0].mxu0 %v989
  %v1230 = vpop.f32.mrb[0].mxu0
  %v1231 = vadd.f32 %v1012, %v1230
  %v1232 = vpop.f32.mrb[0].mxu0
  %1233 = vmatprep.mubr.f32.mxu0 0.0
  %1234 = vmatmul.mubr.f32.gmra.mrb[0].mxu0 %v990
  %v1235 = vpop.f32.mrb[0].mxu0
  %v1236 = vadd.f32 %v1012, %v1235
  %v1237 = vpop.f32.mrb[0].mxu0
  %1238 = vdwg.mxu0
  %vm1239 = vcmask 48128
  %1240 = vst.msk [vmem:[%s9] sm:$0xff] %vm1239, %v1081
  %1241 = vst.msk [vmem:[%s9 + $0x8] sm:$0xff] %vm1239, %v1086
  %1242 = vst.msk [vmem:[%s9 + $0x10] sm:$0xff] %vm1239, %v1091
  %1243 = vst.msk [vmem:[%s9 + $0x18] sm:$0xff] %vm1239, %v1096
  %1244 = vst.msk [vmem:[%s9 + $0x20] sm:$0xff] %vm1239, %v1101
  %1245 = vst.msk [vmem:[%s9 + $0x28] sm:$0xff] %vm1239, %v1106
  %1246 = vst.msk [vmem:[%s9 + $0x30] sm:$0xff] %vm1239, %v1111
  %1247 = vst.msk [vmem:[%s9 + $0x38] sm:$0xff] %vm1239, %v1116
  %1248 = vst.msk [vmem:[%s9 + $0x40] sm:$0xff] %vm1239, %v1121
  %1249 = vst.msk [vmem:[%s9 + $0x48] sm:$0xff] %vm1239, %v1126
  %1250 = vst.msk [vmem:[%s9 + $0x50] sm:$0xff] %vm1239, %v1131
  %1251 = vst.msk [vmem:[%s9 + $0x58] sm:$0xff] %vm1239, %v1136
  %1252 = vst.msk [vmem:[%s9 + $0x60] sm:$0xff] %vm1239, %v1141
  %1253 = vst.msk [vmem:[%s9 + $0x68] sm:$0xff] %vm1239, %v1146
  %1254 = vst.msk [vmem:[%s9 + $0x70] sm:$0xff] %vm1239, %v1151
  %1255 = vst.msk [vmem:[%s9 + $0x78] sm:$0xff] %vm1239, %v1156
  %1256 = vst.msk [vmem:[%s9 + $0x80] sm:$0xff] %vm1239, %v1161
  %1257 = vst.msk [vmem:[%s9 + $0x88] sm:$0xff] %vm1239, %v1166
  %1258 = vst.msk [vmem:[%s9 + $0x90] sm:$0xff] %vm1239, %v1171
  %1259 = vst.msk [vmem:[%s9 + $0x98] sm:$0xff] %vm1239, %v1176
  %1260 = vst.msk [vmem:[%s9 + $0xa0] sm:$0xff] %vm1239, %v1181
  %1261 = vst.msk [vmem:[%s9 + $0xa8] sm:$0xff] %vm1239, %v1186
  %1262 = vst.msk [vmem:[%s9 + $0xb0] sm:$0xff] %vm1239, %v1191
  %1263 = vst.msk [vmem:[%s9 + $0xb8] sm:$0xff] %vm1239, %v1196
  %1264 = vst.msk [vmem:[%s9 + $0xc0] sm:$0xff] %vm1239, %v1201
  %1265 = vst.msk [vmem:[%s9 + $0xc8] sm:$0xff] %vm1239, %v1206
  %1266 = vst.msk [vmem:[%s9 + $0xd0] sm:$0xff] %vm1239, %v1211
  %1267 = vst.msk [vmem:[%s9 + $0xd8] sm:$0xff] %vm1239, %v1216
  %1268 = vst.msk [vmem:[%s9 + $0xe0] sm:$0xff] %vm1239, %v1221
  %1269 = vst.msk [vmem:[%s9 + $0xe8] sm:$0xff] %vm1239, %v1226
  %1270 = vst.msk [vmem:[%s9 + $0xf0] sm:$0xff] %vm1239, %v1231
  %1271 = vst.msk [vmem:[%s9 + $0xf8] sm:$0xff] %vm1239, %v1236
  // Predicated region
  $region38: #{tpu_custom_call.1} parent=0 // pred_check
    _
  $region39: #{tpu_custom_call.1} parent=0 // pred_check_branch
    %1273 = sbr.rel (0) target = $region41
  $region40: #{tpu_custom_call.1} parent=0 // pred_region
    _
  $region41: #{tpu_custom_call.1} parent=0 // pred_fallthru
    _
  // Predicated region
  $region42: #{tpu_custom_call.1} parent=0 // pred_check
    _
  $region43: #{tpu_custom_call.1} parent=0 // pred_check_branch
    %1275 = sbr.rel (0) target = $region45
  $region44: #{tpu_custom_call.1} parent=0 // pred_region
    _
  $region45: #{tpu_custom_call.1} parent=0 // pred_fallthru
    _

</llo_original>
